<compile_context>
chip_gen: v7x
topology: tpu7x:2x2x1
jax: 0.10.0
libtpu: 0.0.40
codegen_flags: <defaults>
</compile_context>

<pallas_src>
import functools

import jax
import jax.numpy as jnp
from jax.experimental import pallas as pl
from jax.experimental.pallas import tpu as pltpu


def _round_up(n: int, m: int) -> int:
    return ((n + m - 1) // m) * m


def _ffn_kernel(x_ref, w13_ref, b13_ref, w2_ref, b2_ref, o_ref, acc_ref):
    """Grid = (token_tiles, hidden_tiles). Hidden axis is the reduction axis."""
    h = pl.program_id(1)
    th = w2_ref.shape[0]  # hidden tile size (static)

    @pl.when(h == 0)
    def _init():
        acc_ref[...] = jnp.zeros_like(acc_ref)

    x = x_ref[...]                                               # (tm, D) bf16
    # Fused gate/up projection: one matmul with N = 2*th, f32 accumulation.
    h13 = jnp.dot(x, w13_ref[...], preferred_element_type=jnp.float32)
    h13 = h13 + b13_ref[...]                                     # (tm, 2*th) f32
    gate = h13[:, :th]
    up = h13[:, th:]
    gated = gate * jax.nn.sigmoid(gate) * up                     # SiLU(gate) * up, f32

    # Down projection for this hidden slice, accumulated in f32 scratch.
    acc_ref[...] += jnp.dot(gated.astype(w2_ref.dtype), w2_ref[...],
                            preferred_element_type=jnp.float32)

    @pl.when(h == pl.num_programs(1) - 1)
    def _finalize():
        o_ref[...] = (acc_ref[...] + b2_ref[...]).astype(o_ref.dtype)


def feed_forward(x, params, *, tm=256, th=512, compute_dtype=jnp.bfloat16):
    """x: [batch, seq, dim]. params: w1[D,H], b1[H], w3[D,H], b3[H], w2[H,D], b2[D].

    Weights are stored [in_features, out_features] (transposed vs PyTorch)."""
    B, S, D = x.shape
    H = params["w1"].shape[1]

    w1, b1 = params["w1"], params["b1"]
    w3, b3 = params["w3"], params["b3"]
    w2, b2 = params["w2"], params["b2"]

    # ---- hidden-dimension tiling (pad H so it divides evenly) ----------------
    if H <= th:
        th = H
        Hp = H
    else:
        th = max(128, th - th % 128)          # keep lane-aligned tiles
        Hp = _round_up(H, th)
    if Hp != H:
        pad_h = Hp - H
        w1 = jnp.pad(w1, ((0, 0), (0, pad_h)))
        w3 = jnp.pad(w3, ((0, 0), (0, pad_h)))
        b1 = jnp.pad(b1, ((0, pad_h),))
        b3 = jnp.pad(b3, ((0, pad_h),))
        w2 = jnp.pad(w2, ((0, pad_h), (0, 0)))
    nh = Hp // th

    # Fuse w1/w3 per hidden tile: columns [w1_tile | w3_tile] for each tile.
    w13 = jnp.concatenate(
        [w1.reshape(D, nh, th), w3.reshape(D, nh, th)], axis=2
    ).reshape(D, nh * 2 * th).astype(compute_dtype)
    b13 = jnp.concatenate(
        [b1.reshape(nh, th), b3.reshape(nh, th)], axis=1
    ).reshape(1, nh * 2 * th).astype(jnp.float32)
    w2c = w2.astype(compute_dtype)
    b2c = b2.reshape(1, D).astype(jnp.float32)

    # ---- token tiling (pad tokens instead of asserting divisibility) ---------
    tokens = B * S
    if tokens <= tm:
        tm = _round_up(tokens, 8)
    tokens_p = _round_up(tokens, tm)
    x2d = x.reshape(tokens, D).astype(compute_dtype)
    if tokens_p != tokens:
        x2d = jnp.pad(x2d, ((0, tokens_p - tokens), (0, 0)))

    num_token_tiles = tokens_p // tm
    grid = (num_token_tiles, nh)

    # Advisory cost estimate for the XLA scheduler.
    itemsize = jnp.dtype(compute_dtype).itemsize
    cost = pl.CostEstimate(
        flops=6 * tokens_p * D * Hp,                    # 2*T*D*2H + 2*T*H*D
        transcendentals=tokens_p * Hp,                  # sigmoid
        bytes_accessed=(x2d.size * itemsize
                        + tokens_p * D * jnp.dtype(x.dtype).itemsize
                        + num_token_tiles * (w13.size * itemsize
                                             + w2c.size * itemsize
                                             + b13.size * 4 + b2c.size * 4)),
    )

    out2d = pl.pallas_call(
        _ffn_kernel,
        out_shape=jax.ShapeDtypeStruct((tokens_p, D), x.dtype),
        grid_spec=pltpu.PrefetchScalarGridSpec(
            num_scalar_prefetch=0,
            grid=grid,
            in_specs=[
                pl.BlockSpec((tm, D), lambda i, h: (i, 0)),        # x tile
                pl.BlockSpec((D, 2 * th), lambda i, h: (0, h)),    # fused w1|w3 tile
                pl.BlockSpec((1, 2 * th), lambda i, h: (0, h)),    # fused b1|b3 tile
                pl.BlockSpec((th, D), lambda i, h: (h, 0)),        # w2 tile
                pl.BlockSpec((1, D), lambda i, h: (0, 0)),         # b2
            ],
            out_specs=pl.BlockSpec((tm, D), lambda i, h: (i, 0)),
            scratch_shapes=[pltpu.VMEM((tm, D), jnp.float32)],     # f32 accumulator
        ),
        compiler_params=pltpu.CompilerParams(
            dimension_semantics=("parallel", "arbitrary"),
            vmem_limit_bytes=48 * 1024 * 1024,
        ),
        cost_estimate=cost,
    )(x2d, w13, b13, w2c, b2c)

    return out2d[:tokens].reshape(B, S, D)


def init_params(key, dim, hidden_dim, dtype=jnp.float32):
    """nn.Linear-style init (uniform +/- 1/sqrt(fan_in)); weights stored [in, out]."""
    k1, k2, k3, k4, k5, k6 = jax.random.split(key, 6)
    lim1 = 1.0 / (dim ** 0.5)
    lim2 = 1.0 / (hidden_dim ** 0.5)
    return {
        "w1": jax.random.uniform(k1, (dim, hidden_dim), dtype, -lim1, lim1),
        "b1": jax.random.uniform(k2, (hidden_dim,), dtype, -lim1, lim1),
        "w3": jax.random.uniform(k3, (dim, hidden_dim), dtype, -lim1, lim1),
        "b3": jax.random.uniform(k4, (hidden_dim,), dtype, -lim1, lim1),
        "w2": jax.random.uniform(k5, (hidden_dim, dim), dtype, -lim2, lim2),
        "b2": jax.random.uniform(k6, (dim,), dtype, -lim2, lim2),
    }


def _reference(x, p):
    h1 = x @ p["w1"] + p["b1"]
    h3 = x @ p["w3"] + p["b3"]
    return (jax.nn.silu(h1) * h3) @ p["w2"] + p["b2"]


if __name__ == "__main__":
    # Small but lane-aligned shapes (dim multiple of 128 for dense vst).
    B, S, D, H = 2, 8, 128, 256
    key = jax.random.PRNGKey(0)
    kx, kp = jax.random.split(key)

    x = jax.random.normal(kx, (B, S, D), dtype=jnp.float32)
    params = init_params(kp, D, H)

    ffn = jax.jit(functools.partial(feed_forward, tm=256, th=512))
    out = jax.block_until_ready(ffn(x, params))

    ref = _reference(x, params)
    assert out.shape == (B, S, D)
    # bf16 matmuls with f32 accumulation -> looser tolerance than pure f32.
    assert jnp.allclose(out, ref, atol=3e-2, rtol=3e-2), "mismatch vs reference"

    print("KERNEL_OK")
</pallas_src>

<mosaic_0001>
module attributes {stable_mosaic.version = 11 : i64} {
  func.func @_ffn_kernel(%arg0: i32, %arg1: i32, %arg2: memref<16x128xbf16, #tpu.memory_space<vmem>>, %arg3: memref<128x512xbf16, #tpu.memory_space<vmem>>, %arg4: memref<1x512xf32, #tpu.memory_space<vmem>>, %arg5: memref<256x128xbf16, #tpu.memory_space<vmem>>, %arg6: memref<1x128xf32, #tpu.memory_space<vmem>>, %arg7: memref<16x128xf32, #tpu.memory_space<vmem>>, %arg8: memref<16x128xf32, #tpu.memory_space<vmem>>) attributes {dimension_semantics = [#tpu.dimension_semantics<parallel>, #tpu.dimension_semantics<arbitrary>], iteration_bounds = array<i64: 1, 1>, scalar_prefetch = 0 : i64, scratch_operands = 1 : i64, tpu.core_type = #tpu.core_type<tc>, window_params = [{transform_indices = @transform_0, window_bounds = array<i64: 16, 128>}, {transform_indices = @transform_1, window_bounds = array<i64: 128, 512>}, {transform_indices = @transform_2, window_bounds = array<i64: 1, 512>}, {transform_indices = @transform_3, window_bounds = array<i64: 256, 128>}, {pipeline_mode = #tpu.pipeline_mode<synchronous>, transform_indices = @transform_4, window_bounds = array<i64: 1, 128>}, {transform_indices = @transform_5, window_bounds = array<i64: 16, 128>}]} {
    %c0_i32 = arith.constant 0 : i32
    %0 = arith.cmpi eq, %arg1, %c0_i32 : i32
    %1 = arith.extui %0 : i1 to i32
    %c0_i32_0 = arith.constant 0 : i32
    %2 = arith.cmpi ne, %1, %c0_i32_0 : i32
    scf.if %2 {
      %cst_16 = arith.constant 0.000000e+00 : f32
      %27 = vector.broadcast %cst_16 : f32 to vector<16x128xf32>
      %c0_17 = arith.constant 0 : index
      %c0_18 = arith.constant 0 : index
      %28 = vector.load %arg8[%c0_17, %c0_18] : memref<16x128xf32, #tpu.memory_space<vmem>>, vector<16x128xf32>
      tpu.vector_store %arg8[%c0_17, %c0_18], %27 {strides = array<i32>} : memref<16x128xf32, #tpu.memory_space<vmem>>, vector<16x128xf32>,
    } else {
    }
    %c0 = arith.constant 0 : index
    %c0_1 = arith.constant 0 : index
    %3 = vector.load %arg2[%c0, %c0_1] : memref<16x128xbf16, #tpu.memory_space<vmem>>, vector<16x128xbf16>
    %c0_2 = arith.constant 0 : index
    %c0_3 = arith.constant 0 : index
    %4 = vector.load %arg3[%c0_2, %c0_3] : memref<128x512xbf16, #tpu.memory_space<vmem>>, vector<128x512xbf16>
    %cst = arith.constant dense<0.000000e+00> : vector<16x512xf32>
    %5 = tpu.matmul %3, %4, %cst {dimension_numbers = #tpu.dot_dimension_numbers<[1], [0], [0], [1], [0, 0, 1, 1], [], []>} : vector<16x128xbf16>, vector<128x512xbf16>, vector<16x512xf32> -> vector<16x512xf32>
    %c0_4 = arith.constant 0 : index
    %c0_5 = arith.constant 0 : index
    %6 = vector.load %arg4[%c0_4, %c0_5] : memref<1x512xf32, #tpu.memory_space<vmem>>, vector<1x512xf32>
    %7 = vector.broadcast %6 : vector<1x512xf32> to vector<16x512xf32>
    %8 = arith.addf %5, %7 : vector<16x512xf32>
    %9 = vector.extract_strided_slice %8 {offsets = [0, 0], sizes = [16, 256], strides = [1, 1]} : vector<16x512xf32> to vector<16x256xf32>
    %10 = vector.extract_strided_slice %8 {offsets = [0, 256], sizes = [16, 256], strides = [1, 1]} : vector<16x512xf32> to vector<16x256xf32>
    %11 = arith.negf %9 : vector<16x256xf32>
    %12 = math.exp %11 : vector<16x256xf32>
    %cst_6 = arith.constant 1.000000e+00 : f32
    %13 = vector.broadcast %cst_6 : f32 to vector<16x256xf32>
    %14 = arith.addf %13, %12 : vector<16x256xf32>
    %15 = arith.divf %13, %14 : vector<16x256xf32>
    %16 = arith.mulf %9, %15 : vector<16x256xf32>
    %17 = arith.mulf %16, %10 : vector<16x256xf32>
    %c0_7 = arith.constant 0 : index
    %c0_8 = arith.constant 0 : index
    %18 = vector.load %arg8[%c0_7, %c0_8] : memref<16x128xf32, #tpu.memory_space<vmem>>, vector<16x128xf32>
    %19 = arith.truncf %17 : vector<16x256xf32> to vector<16x256xbf16>
    %c0_9 = arith.constant 0 : index
    %c0_10 = arith.constant 0 : index
    %20 = vector.load %arg5[%c0_9, %c0_10] : memref<256x128xbf16, #tpu.memory_space<vmem>>, vector<256x128xbf16>
    %cst_11 = arith.constant dense<0.000000e+00> : vector<16x128xf32>
    %21 = tpu.matmul %19, %20, %cst_11 {dimension_numbers = #tpu.dot_dimension_numbers<[1], [0], [0], [1], [0, 0, 1, 1], [], []>} : vector<16x256xbf16>, vector<256x128xbf16>, vector<16x128xf32> -> vector<16x128xf32>
    %22 = arith.addf %18, %21 : vector<16x128xf32>
    %c0_12 = arith.constant 0 : index
    %c0_13 = arith.constant 0 : index
    %23 = vector.load %arg8[%c0_12, %c0_13] : memref<16x128xf32, #tpu.memory_space<vmem>>, vector<16x128xf32>
    tpu.vector_store %arg8[%c0_12, %c0_13], %22 {strides = array<i32>} : memref<16x128xf32, #tpu.memory_space<vmem>>, vector<16x128xf32>,
    %c0_i32_14 = arith.constant 0 : i32
    %24 = arith.cmpi eq, %arg1, %c0_i32_14 : i32
    %25 = arith.extui %24 : i1 to i32
    %c0_i32_15 = arith.constant 0 : i32
    %26 = arith.cmpi ne, %25, %c0_i32_15 : i32
    scf.if %26 {
      %c0_16 = arith.constant 0 : index
      %c0_17 = arith.constant 0 : index
      %27 = vector.load %arg8[%c0_16, %c0_17] : memref<16x128xf32, #tpu.memory_space<vmem>>, vector<16x128xf32>
      %c0_18 = arith.constant 0 : index
      %c0_19 = arith.constant 0 : index
      %28 = vector.load %arg6[%c0_18, %c0_19] : memref<1x128xf32, #tpu.memory_space<vmem>>, vector<1x128xf32>
      %29 = vector.broadcast %28 : vector<1x128xf32> to vector<16x128xf32>
      %30 = arith.addf %27, %29 : vector<16x128xf32>
      %c0_20 = arith.constant 0 : index
      %c0_21 = arith.constant 0 : index
      %31 = vector.load %arg7[%c0_20, %c0_21] : memref<16x128xf32, #tpu.memory_space<vmem>>, vector<16x128xf32>
      tpu.vector_store %arg7[%c0_20, %c0_21], %30 {strides = array<i32>} : memref<16x128xf32, #tpu.memory_space<vmem>>, vector<16x128xf32>,
    } else {
    }
    return
  }
  func.func @transform_0(%arg0: i32, %arg1: i32) -> (i32, i32) {
    %c0_i32 = arith.constant 0 : i32
    %c0_i32_0 = arith.constant 0 : i32
    return %arg0, %c0_i32 : i32, i32
  }
  func.func @transform_1(%arg0: i32, %arg1: i32) -> (i32, i32) {
    %c0_i32 = arith.constant 0 : i32
    %c0_i32_0 = arith.constant 0 : i32
    return %c0_i32, %arg1 : i32, i32
  }
  func.func @transform_2(%arg0: i32, %arg1: i32) -> (i32, i32) {
    %c0_i32 = arith.constant 0 : i32
    %c0_i32_0 = arith.constant 0 : i32
    return %c0_i32, %arg1 : i32, i32
  }
  func.func @transform_3(%arg0: i32, %arg1: i32) -> (i32, i32) {
    %c0_i32 = arith.constant 0 : i32
    %c0_i32_0 = arith.constant 0 : i32
    return %arg1, %c0_i32 : i32, i32
  }
  func.func @transform_4(%arg0: i32, %arg1: i32) -> (i32, i32) {
    %c0_i32 = arith.constant 0 : i32
    %c0_i32_0 = arith.constant 0 : i32
    %c0_i32_1 = arith.constant 0 : i32
    return %c0_i32, %c0_i32_0 : i32, i32
  }
  func.func @transform_5(%arg0: i32, %arg1: i32) -> (i32, i32) {
    %c0_i32 = arith.constant 0 : i32
    %c0_i32_0 = arith.constant 0 : i32
    return %arg0, %c0_i32 : i32, i32
  }
}

</mosaic_0001>

<llo_original>
// kernel: feed_forward.1
$region0: #{feed_forward.1}
  #allocation0 [shape = 'u32[]', space=smem, size = 0x4, offset = 0x4, fixed_abs, tag = 'smem constant byte address 0x4 - core index']
  #allocation1 [shape = 'u32[144,128]{1,0:T(1,128)}', space=vmem, size = 0x12000, scoped, tag = 'internal scratch']
  #allocation2 [shape = 'f32[16,128]{1,0:T(8,128)}', space=vmem, size = 0x2000, scoped, tag = 'scratch operand']
  %s0 = inlined_call_operand.vmem [shape: bf16[16,128], index: 0, kind: input, shape index: {}]
  %s1 = inlined_call_operand.vmem [shape: bf16[128,512], index: 1, kind: input, shape index: {}]
  %s2 = inlined_call_operand.vmem [shape: f32[1,512], index: 2, kind: input, shape index: {}]
  %s3 = inlined_call_operand.vmem [shape: bf16[256,128], index: 3, kind: input, shape index: {}]
  %s4 = inlined_call_operand.vmem [shape: f32[1,128], index: 4, kind: input, shape index: {}]
  %s5 = inlined_call_operand.hbm [shape: f32[16,128], index: 5, kind: output, shape index: {}]
  %s6 = sld [smem:[#allocation0]]
  $region38: #{feed_forward.1} parent=0
    _
  %s8 = ssub.s32 1, %s6
  %s9 = scalar_select 0, %s8, %s6
  $region1: #{feed_forward.1} parent=0
    #allocation3 [shape = 'u8[8192]{0}', space=vmem, size = 0x2000, scoped, tag = 'output window, operand 0, single buffered']
    #allocation4 [shape = 's32[1]{0}', space=sflag, size = 0x4, scoped, tag = 'scoped memory for feed_forward.1']
    %10 = vsyncpa [#allocation4], 0
    // Predicated region
    $region2: #{feed_forward.1} parent=1 // pred_check
      _
    $region3: #{feed_forward.1} parent=1 // pred_check_branch
      %12 = sbr.rel (0) target = $region5
    $region4: #{feed_forward.1} parent=1 // pred_region
      _
    $region5: #{feed_forward.1} parent=1 // pred_fallthru
      _
    // Predicated region
    $region6: #{feed_forward.1} parent=1 // pred_check
      _
    $region7: #{feed_forward.1} parent=1 // pred_check_branch
      %14 = sbr.rel (0) target = $region9
    $region8: #{feed_forward.1} parent=1 // pred_region
      _
    $region9: #{feed_forward.1} parent=1 // pred_fallthru
      _
    // Predicated region
    $region10: #{feed_forward.1} parent=1 // pred_check
      _
    $region11: #{feed_forward.1} parent=1 // pred_check_branch
      %16 = sbr.rel (0) target = $region13
    $region12: #{feed_forward.1} parent=1 // pred_region
      _
    $region13: #{feed_forward.1} parent=1 // pred_fallthru
      _
    // Predicated region
    $region14: #{feed_forward.1} parent=1 // pred_check
      _
    $region15: #{feed_forward.1} parent=1 // pred_check_branch
      %18 = sbr.rel (0) target = $region17
    $region16: #{feed_forward.1} parent=1 // pred_region
      _
    $region17: #{feed_forward.1} parent=1 // pred_fallthru
      _
    // Predicated region
    $region18: #{feed_forward.1} parent=1 // pred_check
      _
    $region19: #{feed_forward.1} parent=1 // pred_check_branch
      %20 = sbr.rel (0) target = $region21
    $region20: #{feed_forward.1} parent=1 // pred_region
      _
    $region21: #{feed_forward.1} parent=1 // pred_fallthru
      _
    %p22 = scmp.eq.s32.totalorder 0, 0
    // Predicated region
    $region22: #{feed_forward.1} parent=1 // pred_check
      %p23 = pneg %p22
    $region23: #{feed_forward.1} parent=1 // pred_check_branch
      %25 = sbr.rel (%p23) target = $region25
    $region24: #{feed_forward.1} parent=1 // pred_region
      %26 = vst [vmem:[#allocation2] sm:$0xff] 0.0
      %27 = vst [vmem:[#allocation2 + $0x8] sm:$0xff] 0.0
    $region25: #{feed_forward.1} parent=1 // pred_fallthru
      _
    %v28 = vld [vmem:[%s0] sm:$0xf]
    %v29 = vld [vmem:[%s0 + $0x4] sm:$0xf]
    %v30 = vld [vmem:[%s1] sm:$0xff]
    %v31 = vld [vmem:[%s1 + $0x8] sm:$0xff]
    %v32 = vld [vmem:[%s1 + $0x10] sm:$0xff]
    %v33 = vld [vmem:[%s1 + $0x18] sm:$0xff]
    %v34 = vld [vmem:[%s1 + $0x20] sm:$0xff]
    %v35 = vld [vmem:[%s1 + $0x28] sm:$0xff]
    %v36 = vld [vmem:[%s1 + $0x30] sm:$0xff]
    %v37 = vld [vmem:[%s1 + $0x38] sm:$0xff]
    %v38 = vld [vmem:[%s1 + $0x40] sm:$0xff]
    %v39 = vld [vmem:[%s1 + $0x48] sm:$0xff]
    %v40 = vld [vmem:[%s1 + $0x50] sm:$0xff]
    %v41 = vld [vmem:[%s1 + $0x58] sm:$0xff]
    %v42 = vld [vmem:[%s1 + $0x60] sm:$0xff]
    %v43 = vld [vmem:[%s1 + $0x68] sm:$0xff]
    %v44 = vld [vmem:[%s1 + $0x70] sm:$0xff]
    %v45 = vld [vmem:[%s1 + $0x78] sm:$0xff]
    %v46 = vld [vmem:[%s1 + $0x80] sm:$0xff]
    %v47 = vld [vmem:[%s1 + $0x88] sm:$0xff]
    %v48 = vld [vmem:[%s1 + $0x90] sm:$0xff]
    %v49 = vld [vmem:[%s1 + $0x98] sm:$0xff]
    %v50 = vld [vmem:[%s1 + $0xa0] sm:$0xff]
    %v51 = vld [vmem:[%s1 + $0xa8] sm:$0xff]
    %v52 = vld [vmem:[%s1 + $0xb0] sm:$0xff]
    %v53 = vld [vmem:[%s1 + $0xb8] sm:$0xff]
    %v54 = vld [vmem:[%s1 + $0xc0] sm:$0xff]
    %v55 = vld [vmem:[%s1 + $0xc8] sm:$0xff]
    %v56 = vld [vmem:[%s1 + $0xd0] sm:$0xff]
    %v57 = vld [vmem:[%s1 + $0xd8] sm:$0xff]
    %v58 = vld [vmem:[%s1 + $0xe0] sm:$0xff]
    %v59 = vld [vmem:[%s1 + $0xe8] sm:$0xff]
    %v60 = vld [vmem:[%s1 + $0xf0] sm:$0xff]
    %v61 = vld [vmem:[%s1 + $0xf8] sm:$0xff]
    %v62 = vld [vmem:[%s2] sm:$0xf]
    %v64 = vlaneseq
    %v65 = vshrl.u32 %v64, 7
    %v66 = vsub.s32 0, %v65
    %v67 = vrot.slane %v62, %v66
    %v68 = vlaneseq
    %v69 = vshrl.u32 %v68, 7
    %v70 = vsub.s32 1, %v69
    %v71 = vrot.slane %v62, %v70
    %v72 = vlaneseq
    %v73 = vshrl.u32 %v72, 7
    %v74 = vsub.s32 2, %v73
    %v75 = vrot.slane %v62, %v74
    %v76 = vlaneseq
    %v77 = vshrl.u32 %v76, 7
    %v78 = vsub.s32 3, %v77
    %v79 = vrot.slane %v62, %v78
    %v86 = vunpack.c.l.b16 %v28
    %v87 = vunpack.c.l.b16 %v29
    %v88 = vpack.c.b16 %v87, %v86
    %v122 = vunpack.c.l.b16 %v30
    %v123 = vunpack.c.h.b16 %v30
    %v124 = vunpack.c.l.b16 %v31
    %v125 = vunpack.c.h.b16 %v31
    %v126 = vunpack.c.l.b16 %v32
    %v127 = vunpack.c.h.b16 %v32
    %v128 = vunpack.c.l.b16 %v33
    %v129 = vunpack.c.h.b16 %v33
    %v130 = vunpack.c.l.b16 %v34
    %v131 = vunpack.c.h.b16 %v34
    %v132 = vunpack.c.l.b16 %v35
    %v133 = vunpack.c.h.b16 %v35
    %v134 = vunpack.c.l.b16 %v36
    %v135 = vunpack.c.h.b16 %v36
    %v136 = vunpack.c.l.b16 %v37
    %v137 = vunpack.c.h.b16 %v37
    %v138 = vunpack.c.l.b16 %v38
    %v139 = vunpack.c.h.b16 %v38
    %v140 = vunpack.c.l.b16 %v39
    %v141 = vunpack.c.h.b16 %v39
    %v142 = vunpack.c.l.b16 %v40
    %v143 = vunpack.c.h.b16 %v40
    %v144 = vunpack.c.l.b16 %v41
    %v145 = vunpack.c.h.b16 %v41
    %v146 = vunpack.c.l.b16 %v42
    %v147 = vunpack.c.h.b16 %v42
    %v148 = vunpack.c.l.b16 %v43
    %v149 = vunpack.c.h.b16 %v43
    %v150 = vunpack.c.l.b16 %v44
    %v151 = vunpack.c.h.b16 %v44
    %v152 = vunpack.c.l.b16 %v45
    %v153 = vunpack.c.h.b16 %v45
    %v154 = vunpack.c.l.b16 %v46
    %v155 = vunpack.c.h.b16 %v46
    %v156 = vunpack.c.l.b16 %v47
    %v157 = vunpack.c.h.b16 %v47
    %v158 = vunpack.c.l.b16 %v48
    %v159 = vunpack.c.h.b16 %v48
    %v160 = vunpack.c.l.b16 %v49
    %v161 = vunpack.c.h.b16 %v49
    %v162 = vunpack.c.l.b16 %v50
    %v163 = vunpack.c.h.b16 %v50
    %v164 = vunpack.c.l.b16 %v51
    %v165 = vunpack.c.h.b16 %v51
    %v166 = vunpack.c.l.b16 %v52
    %v167 = vunpack.c.h.b16 %v52
    %v168 = vunpack.c.l.b16 %v53
    %v169 = vunpack.c.h.b16 %v53
    %v170 = vunpack.c.l.b16 %v54
    %v171 = vunpack.c.h.b16 %v54
    %v172 = vunpack.c.l.b16 %v55
    %v173 = vunpack.c.h.b16 %v55
    %v174 = vunpack.c.l.b16 %v56
    %v175 = vunpack.c.h.b16 %v56
    %v176 = vunpack.c.l.b16 %v57
    %v177 = vunpack.c.h.b16 %v57
    %v178 = vunpack.c.l.b16 %v58
    %v179 = vunpack.c.h.b16 %v58
    %v180 = vunpack.c.l.b16 %v59
    %v181 = vunpack.c.h.b16 %v59
    %v182 = vunpack.c.l.b16 %v60
    %v183 = vunpack.c.h.b16 %v60
    %v184 = vunpack.c.l.b16 %v61
    %v185 = vunpack.c.h.b16 %v61
    %v186 = vpack.c.b16 %v126, %v122
    %v187 = vpack.c.b16 %v127, %v123
    %v188 = vpack.c.b16 %v128, %v124
    %v189 = vpack.c.b16 %v129, %v125
    %v190 = vpack.c.b16 %v134, %v130
    %v191 = vpack.c.b16 %v135, %v131
    %v192 = vpack.c.b16 %v136, %v132
    %v193 = vpack.c.b16 %v137, %v133
    %v194 = vpack.c.b16 %v142, %v138
    %v195 = vpack.c.b16 %v143, %v139
    %v196 = vpack.c.b16 %v144, %v140
    %v197 = vpack.c.b16 %v145, %v141
    %v198 = vpack.c.b16 %v150, %v146
    %v199 = vpack.c.b16 %v151, %v147
    %v200 = vpack.c.b16 %v152, %v148
    %v201 = vpack.c.b16 %v153, %v149
    %v202 = vpack.c.b16 %v158, %v154
    %v203 = vpack.c.b16 %v159, %v155
    %v204 = vpack.c.b16 %v160, %v156
    %v205 = vpack.c.b16 %v161, %v157
    %v206 = vpack.c.b16 %v166, %v162
    %v207 = vpack.c.b16 %v167, %v163
    %v208 = vpack.c.b16 %v168, %v164
    %v209 = vpack.c.b16 %v169, %v165
    %v210 = vpack.c.b16 %v174, %v170
    %v211 = vpack.c.b16 %v175, %v171
    %v212 = vpack.c.b16 %v176, %v172
    %v213 = vpack.c.b16 %v177, %v173
    %v214 = vpack.c.b16 %v182, %v178
    %v215 = vpack.c.b16 %v183, %v179
    %v216 = vpack.c.b16 %v184, %v180
    %v217 = vpack.c.b16 %v185, %v181
    %250 = vmatprep.subr.bf16.mxu0 %v187
    %251 = vmatpush1.bf16.msra.mxu0 %v186
    %252 = vmatprep.subr.bf16.mxu0 %v191
    %253 = vmatpush1.bf16.msra.mxu0 %v190
    %254 = vmatprep.subr.bf16.mxu0 %v195
    %255 = vmatpush1.bf16.msra.mxu0 %v194
    %256 = vmatprep.subr.bf16.mxu0 %v199
    %257 = vmatpush1.bf16.msra.mxu0 %v198
    %258 = vmatprep.subr.bf16.mxu0 %v203
    %259 = vmatpush1.bf16.msra.mxu0 %v202
    %260 = vmatprep.subr.bf16.mxu0 %v207
    %261 = vmatpush1.bf16.msra.mxu0 %v206
    %262 = vmatprep.subr.bf16.mxu0 %v211
    %263 = vmatpush1.bf16.msra.mxu0 %v210
    %264 = vmatprep.subr.bf16.mxu0 %v215
    %265 = vmatpush1.bf16.msra.mxu0 %v214
    %266 = vmatprep.subr.bf16.mxu0 0
    %267 = vmatpush1.bf16.msra.mxu0 0
    %268 = vmatprep.subr.bf16.mxu0 0
    %269 = vmatpush1.bf16.msra.mxu0 0
    %270 = vmatprep.subr.bf16.mxu0 0
    %271 = vmatpush1.bf16.msra.mxu0 0
    %272 = vmatprep.subr.bf16.mxu0 0
    %273 = vmatpush1.bf16.msra.mxu0 0
    %274 = vmatprep.subr.bf16.mxu0 0
    %275 = vmatpush1.bf16.msra.mxu0 0
    %276 = vmatprep.subr.bf16.mxu0 0
    %277 = vmatpush1.bf16.msra.mxu0 0
    %278 = vmatprep.subr.bf16.mxu0 0
    %279 = vmatpush1.bf16.msra.mxu0 0
    %280 = vmatprep.subr.bf16.mxu0 0
    %281 = vmatpush1.bf16.msra.mxu0 0
    %282 = vmatprep.mubr.bf16.mxu0 0
    %283 = vmatmul.mubr.bf16.gmra.mrb[0].mxu0 %v88
    %v284 = vpop.f32.mrb[0].mxu0
    %v285 = vadd.f32 %v67, %v284
    %v286 = vpop.f32.mrb[0].mxu0
    %v287 = vadd.f32 %v71, %v286
    %v288 = vpop.f32.mrb[0].mxu0
    %v289 = vadd.f32 %v67, %v288
    %v290 = vpop.f32.mrb[0].mxu0
    %v291 = vadd.f32 %v71, %v290
    %292 = vdwg.mxu0
    %293 = vmatprep.subr.bf16.mxu0 %v189
    %294 = vmatpush1.bf16.msra.mxu0 %v188
    %295 = vmatprep.subr.bf16.mxu0 %v193
    %296 = vmatpush1.bf16.msra.mxu0 %v192
    %297 = vmatprep.subr.bf16.mxu0 %v197
    %298 = vmatpush1.bf16.msra.mxu0 %v196
    %299 = vmatprep.subr.bf16.mxu0 %v201
    %300 = vmatpush1.bf16.msra.mxu0 %v200
    %301 = vmatprep.subr.bf16.mxu0 %v205
    %302 = vmatpush1.bf16.msra.mxu0 %v204
    %303 = vmatprep.subr.bf16.mxu0 %v209
    %304 = vmatpush1.bf16.msra.mxu0 %v208
    %305 = vmatprep.subr.bf16.mxu0 %v213
    %306 = vmatpush1.bf16.msra.mxu0 %v212
    %307 = vmatprep.subr.bf16.mxu0 %v217
    %308 = vmatpush1.bf16.msra.mxu0 %v216
    %309 = vmatprep.subr.bf16.mxu0 0
    %310 = vmatpush1.bf16.msra.mxu0 0
    %311 = vmatprep.subr.bf16.mxu0 0
    %312 = vmatpush1.bf16.msra.mxu0 0
    %313 = vmatprep.subr.bf16.mxu0 0
    %314 = vmatpush1.bf16.msra.mxu0 0
    %315 = vmatprep.subr.bf16.mxu0 0
    %316 = vmatpush1.bf16.msra.mxu0 0
    %317 = vmatprep.subr.bf16.mxu0 0
    %318 = vmatpush1.bf16.msra.mxu0 0
    %319 = vmatprep.subr.bf16.mxu0 0
    %320 = vmatpush1.bf16.msra.mxu0 0
    %321 = vmatprep.subr.bf16.mxu0 0
    %322 = vmatpush1.bf16.msra.mxu0 0
    %323 = vmatprep.subr.bf16.mxu0 0
    %324 = vmatpush1.bf16.msra.mxu0 0
    %325 = vmatprep.mubr.bf16.mxu0 0
    %326 = vmatmul.mubr.bf16.gmra.mrb[0].mxu0 %v88
    %v327 = vpop.f32.mrb[0].mxu0
    %v328 = vadd.f32 %v75, %v327
    %v329 = vpop.f32.mrb[0].mxu0
    %v330 = vadd.f32 %v79, %v329
    %v331 = vpop.f32.mrb[0].mxu0
    %v332 = vadd.f32 %v75, %v331
    %v333 = vpop.f32.mrb[0].mxu0
    %v334 = vadd.f32 %v79, %v333
    %335 = vdwg.mxu0
    %v336 = vxor.u32 %v285, 2147483648
    %v337 = vxor.u32 %v287, 2147483648
    %v338 = vxor.u32 %v289, 2147483648
    %v339 = vxor.u32 %v291, 2147483648
    %v340 = vmul.f32 %v336, 1.442695
    %v341 = vpow.pop %v340
    %v342 = vmul.f32 %v337, 1.442695
    %v343 = vpow.pop %v342
    %v344 = vmul.f32 %v338, 1.442695
    %v345 = vpow.pop %v344
    %v346 = vmul.f32 %v339, 1.442695
    %v347 = vpow.pop %v346
    %v348 = vadd.f32 %v341, 1.0
    %v349 = vadd.f32 %v343, 1.0
    %v350 = vadd.f32 %v345, 1.0
    %v351 = vadd.f32 %v347, 1.0
    %v352 = vrcp.pop %v348
    %v353 = vmul.f32 1.0, %v352
    %v354 = vrcp.pop %v349
    %v355 = vmul.f32 1.0, %v354
    %v356 = vrcp.pop %v350
    %v357 = vmul.f32 1.0, %v356
    %v358 = vrcp.pop %v351
    %v359 = vmul.f32 1.0, %v358
    %v360 = vmul.f32 %v285, %v353
    %v361 = vmul.f32 %v287, %v355
    %v362 = vmul.f32 %v289, %v357
    %v363 = vmul.f32 %v291, %v359
    %v364 = vmul.f32 %v360, %v328
    %v365 = vmul.f32 %v361, %v330
    %v366 = vmul.f32 %v362, %v332
    %v367 = vmul.f32 %v363, %v334
    %v368 = vld [vmem:[#allocation2] sm:$0xff]
    %v369 = vld [vmem:[#allocation2 + $0x8] sm:$0xff]
    %v370 = vpack.c.bf16 %v366, %v364
    %v371 = vpack.c.bf16 %v367, %v365
    %v372 = vld [vmem:[%s3] sm:$0xf]
    %v373 = vld [vmem:[%s3 + $0x4] sm:$0xf]
    %v374 = vld [vmem:[%s3 + $0x8] sm:$0xf]
    %v375 = vld [vmem:[%s3 + $0xc] sm:$0xf]
    %v376 = vld [vmem:[%s3 + $0x10] sm:$0xf]
    %v377 = vld [vmem:[%s3 + $0x14] sm:$0xf]
    %v378 = vld [vmem:[%s3 + $0x18] sm:$0xf]
    %v379 = vld [vmem:[%s3 + $0x1c] sm:$0xf]
    %v380 = vld [vmem:[%s3 + $0x20] sm:$0xf]
    %v381 = vld [vmem:[%s3 + $0x24] sm:$0xf]
    %v382 = vld [vmem:[%s3 + $0x28] sm:$0xf]
    %v383 = vld [vmem:[%s3 + $0x2c] sm:$0xf]
    %v384 = vld [vmem:[%s3 + $0x30] sm:$0xf]
    %v385 = vld [vmem:[%s3 + $0x34] sm:$0xf]
    %v386 = vld [vmem:[%s3 + $0x38] sm:$0xf]
    %v387 = vld [vmem:[%s3 + $0x3c] sm:$0xf]
    %v388 = vld [vmem:[%s3 + $0x40] sm:$0xf]
    %v389 = vld [vmem:[%s3 + $0x44] sm:$0xf]
    %v390 = vld [vmem:[%s3 + $0x48] sm:$0xf]
    %v391 = vld [vmem:[%s3 + $0x4c] sm:$0xf]
    %v392 = vld [vmem:[%s3 + $0x50] sm:$0xf]
    %v393 = vld [vmem:[%s3 + $0x54] sm:$0xf]
    %v394 = vld [vmem:[%s3 + $0x58] sm:$0xf]
    %v395 = vld [vmem:[%s3 + $0x5c] sm:$0xf]
    %v396 = vld [vmem:[%s3 + $0x60] sm:$0xf]
    %v397 = vld [vmem:[%s3 + $0x64] sm:$0xf]
    %v398 = vld [vmem:[%s3 + $0x68] sm:$0xf]
    %v399 = vld [vmem:[%s3 + $0x6c] sm:$0xf]
    %v400 = vld [vmem:[%s3 + $0x70] sm:$0xf]
    %v401 = vld [vmem:[%s3 + $0x74] sm:$0xf]
    %v402 = vld [vmem:[%s3 + $0x78] sm:$0xf]
    %v403 = vld [vmem:[%s3 + $0x7c] sm:$0xf]
    %v436 = vunpack.c.l.b16 %v372
    %v437 = vunpack.c.l.b16 %v373
    %v438 = vunpack.c.l.b16 %v374
    %v439 = vunpack.c.l.b16 %v375
    %v440 = vunpack.c.l.b16 %v376
    %v441 = vunpack.c.l.b16 %v377
    %v442 = vunpack.c.l.b16 %v378
    %v443 = vunpack.c.l.b16 %v379
    %v444 = vunpack.c.l.b16 %v380
    %v445 = vunpack.c.l.b16 %v381
    %v446 = vunpack.c.l.b16 %v382
    %v447 = vunpack.c.l.b16 %v383
    %v448 = vunpack.c.l.b16 %v384
    %v449 = vunpack.c.l.b16 %v385
    %v450 = vunpack.c.l.b16 %v386
    %v451 = vunpack.c.l.b16 %v387
    %v452 = vunpack.c.l.b16 %v388
    %v453 = vunpack.c.l.b16 %v389
    %v454 = vunpack.c.l.b16 %v390
    %v455 = vunpack.c.l.b16 %v391
    %v456 = vunpack.c.l.b16 %v392
    %v457 = vunpack.c.l.b16 %v393
    %v458 = vunpack.c.l.b16 %v394
    %v459 = vunpack.c.l.b16 %v395
    %v460 = vunpack.c.l.b16 %v396
    %v461 = vunpack.c.l.b16 %v397
    %v462 = vunpack.c.l.b16 %v398
    %v463 = vunpack.c.l.b16 %v399
    %v464 = vunpack.c.l.b16 %v400
    %v465 = vunpack.c.l.b16 %v401
    %v466 = vunpack.c.l.b16 %v402
    %v467 = vunpack.c.l.b16 %v403
    %v468 = vpack.c.b16 %v437, %v436
    %v469 = vpack.c.b16 %v439, %v438
    %v470 = vpack.c.b16 %v441, %v440
    %v471 = vpack.c.b16 %v443, %v442
    %v472 = vpack.c.b16 %v445, %v444
    %v473 = vpack.c.b16 %v447, %v446
    %v474 = vpack.c.b16 %v449, %v448
    %v475 = vpack.c.b16 %v451, %v450
    %v476 = vpack.c.b16 %v453, %v452
    %v477 = vpack.c.b16 %v455, %v454
    %v478 = vpack.c.b16 %v457, %v456
    %v479 = vpack.c.b16 %v459, %v458
    %v480 = vpack.c.b16 %v461, %v460
    %v481 = vpack.c.b16 %v463, %v462
    %v482 = vpack.c.b16 %v465, %v464
    %v483 = vpack.c.b16 %v467, %v466
    %500 = vmatprep.subr.bf16.mxu0 0
    %501 = vmatpush1.bf16.msra.mxu0 %v468
    %502 = vmatprep.subr.bf16.mxu0 0
    %503 = vmatpush1.bf16.msra.mxu0 %v469
    %504 = vmatprep.subr.bf16.mxu0 0
    %505 = vmatpush1.bf16.msra.mxu0 %v470
    %506 = vmatprep.subr.bf16.mxu0 0
    %507 = vmatpush1.bf16.msra.mxu0 %v471
    %508 = vmatprep.subr.bf16.mxu0 0
    %509 = vmatpush1.bf16.msra.mxu0 %v472
    %510 = vmatprep.subr.bf16.mxu0 0
    %511 = vmatpush1.bf16.msra.mxu0 %v473
    %512 = vmatprep.subr.bf16.mxu0 0
    %513 = vmatpush1.bf16.msra.mxu0 %v474
    %514 = vmatprep.subr.bf16.mxu0 0
    %515 = vmatpush1.bf16.msra.mxu0 %v475
    %516 = vmatprep.subr.bf16.mxu0 0
    %517 = vmatpush1.bf16.msra.mxu0 %v476
    %518 = vmatprep.subr.bf16.mxu0 0
    %519 = vmatpush1.bf16.msra.mxu0 %v477
    %520 = vmatprep.subr.bf16.mxu0 0
    %521 = vmatpush1.bf16.msra.mxu0 %v478
    %522 = vmatprep.subr.bf16.mxu0 0
    %523 = vmatpush1.bf16.msra.mxu0 %v479
    %524 = vmatprep.subr.bf16.mxu0 0
    %525 = vmatpush1.bf16.msra.mxu0 %v480
    %526 = vmatprep.subr.bf16.mxu0 0
    %527 = vmatpush1.bf16.msra.mxu0 %v481
    %528 = vmatprep.subr.bf16.mxu0 0
    %529 = vmatpush1.bf16.msra.mxu0 %v482
    %530 = vmatprep.subr.bf16.mxu0 0
    %531 = vmatpush1.bf16.msra.mxu0 %v483
    %532 = vmatprep.mubr.bf16.mxu0 %v371
    %533 = vmatmul.mubr.bf16.gmra.mrb[0].mxu0 %v370
    %v534 = vpop.f32.mrb[0].mxu0
    %v535 = vadd.f32 0.0, %v534
    %v536 = vpop.f32.mrb[0].mxu0
    %v537 = vpop.f32.mrb[0].mxu0
    %v538 = vadd.f32 0.0, %v537
    %v539 = vpop.f32.mrb[0].mxu0
    %540 = vdwg.mxu0
    %v541 = vadd.f32 %v368, %v535
    %v542 = vadd.f32 %v369, %v538
    %543 = vst [vmem:[#allocation2] sm:$0xff] %v541
    %544 = vst [vmem:[#allocation2 + $0x8] sm:$0xff] %v542
    // Predicated region
    $region26: #{feed_forward.1} parent=1 // pred_check
      %p545 = pneg %p22
    $region27: #{feed_forward.1} parent=1 // pred_check_branch
      %547 = sbr.rel (%p545) target = $region29
    $region28: #{feed_forward.1} parent=1 // pred_region
      %v548 = vld [vmem:[#allocation2] sm:$0xff]
      %v549 = vld [vmem:[#allocation2 + $0x8] sm:$0xff]
      %v550 = vld [vmem:[%s4] sm:$0x1]
      %v552 = vlaneseq
      %v553 = vshrl.u32 %v552, 7
      %v554 = vsub.s32 0, %v553
      %v555 = vrot.slane %v550, %v554
      %v557 = vadd.f32 %v548, %v555
      %v558 = vadd.f32 %v549, %v555
      %559 = vst [vmem:[#allocation3] sm:$0xff] %v557
      %560 = vst [vmem:[#allocation3 + $0x8] sm:$0xff] %v558
    $region29: #{feed_forward.1} parent=1 // pred_fallthru
      _
    // Predicated region
    $region30: #{feed_forward.1} parent=1 // pred_check
      _
    $region31: #{feed_forward.1} parent=1 // pred_check_branch
      %562 = sbr.rel (0) target = $region33
    $region32: #{feed_forward.1} parent=1 // pred_region
      %s564 = ssub.s32 256, 256
      %565 = vsyncadd [#allocation4], %s564
      %s566 = sshll.u32 [#allocation3], 4
      %s567 = int_to_ptr.vmem [resolvable:$true] %s566
      %572 = dma.vmem_to_hbm [thread:$0]  %s567, 256, %s5, [#allocation4], 128, 128, 8
    $region33: #{feed_forward.1} parent=1 // pred_fallthru
      _
    // Predicated region
    $region34: #{feed_forward.1} parent=1 // pred_check
      _
    $region35: #{feed_forward.1} parent=1 // pred_check_branch
      %574 = sbr.rel (0) target = $region37
    $region36: #{feed_forward.1} parent=1 // pred_region
      %575 = dma.done [#allocation4], 256
    $region37: #{feed_forward.1} parent=1 // pred_fallthru
      _
    %576 = vsyncpa [#allocation4], 1

</llo_original>
